<compile_context>
chip_gen: v7x
topology: tpu7x:2x2x1
jax: 0.10.0
libtpu: 0.0.40
codegen_flags: <defaults>
</compile_context>

<pallas_src>
import jax
import jax.numpy as jnp
from jax.experimental import pallas as pl
from jax.experimental.pallas import tpu as pltpu


def mlp_kernel(x_ref, w1_ref, b1_ref, w2_ref, b2_ref, w3_ref, b3_ref,
               w4_ref, b4_ref, o_ref):
    # All activations are (features, TB): features on sublanes, batch on lanes.
    # Matmul inputs are bf16 (native MXU dtype), accumulation is f32.
    x = x_ref[...].astype(jnp.bfloat16)                                # (4,   TB)
    h = jnp.dot(w1_ref[...], x, preferred_element_type=jnp.float32)    # (128, TB)
    h = jnp.maximum(h + b1_ref[...], 0.0).astype(jnp.bfloat16)
    h = jnp.dot(w2_ref[...], h, preferred_element_type=jnp.float32)    # (64,  TB)
    h = jnp.maximum(h + b2_ref[...], 0.0).astype(jnp.bfloat16)
    h = jnp.dot(w3_ref[...], h, preferred_element_type=jnp.float32)    # (32,  TB)
    h = jnp.maximum(h + b3_ref[...], 0.0).astype(jnp.bfloat16)
    h = jnp.dot(w4_ref[...], h, preferred_element_type=jnp.float32)    # (8,   TB) padded
    o_ref[...] = (h + b4_ref[...]).astype(o_ref.dtype)


def _round_up(n, m):
    return ((n + m - 1) // m) * m


def dyslexia_forward(x, params, *, tb_max=8192):
    """x: (B, 4) float32; params: PyTorch-layout weights (out, in) and biases (out, 1)."""
    B = x.shape[0]
    tb_max = _round_up(max(tb_max, 128), 128)   # guard: tb_max must be a multiple of 128

    w1, b1, w2, b2, w3, b3, w4, b4 = (
        params["w1"], params["b1"], params["w2"], params["b2"],
        params["w3"], params["b3"], params["w4"], params["b4"],
    )

    # --- batch tiling ----------------------------------------------------------
    # Balanced tiles: tb ~= B / n_tiles rounded to a lane multiple, so tail padding
    # stays small.  Force >= 2 tiles when B is large enough so the "parallel" grid
    # axis feeds both v7x TensorCores.
    num_tiles = pl.cdiv(B, tb_max)
    if num_tiles == 1 and B > 256:
        num_tiles = 2
    tb = _round_up(pl.cdiv(B, num_tiles), 128)
    num_tiles = pl.cdiv(B, tb)
    B_pad = tb * num_tiles

    # Batch-on-lanes input: (4, B_pad); padded batch columns are discarded at the end.
    xt = x.T
    if B_pad != B:
        xt = jnp.pad(xt, ((0, 0), (0, B_pad - B)))

    # Cast weights once to bf16 (tiny arrays); biases stay f32 (added post-accumulation).
    w1b = w1.astype(jnp.bfloat16)
    w2b = w2.astype(jnp.bfloat16)
    w3b = w3.astype(jnp.bfloat16)

    # Pad fc4 to 8 output rows for a full-sublane, lane-dense output tile.
    w4p = jnp.zeros((8, w4.shape[1]), jnp.bfloat16).at[:3].set(w4.astype(jnp.bfloat16))
    b4p = jnp.zeros((8, 1), b4.dtype).at[:3].set(b4)

    def const_spec(a):
        # Full-array block, constant block index -> DMA'd once, stays VMEM-resident.
        return pl.BlockSpec(a.shape, lambda i: (0,) * a.ndim)

    out = pl.pallas_call(
        mlp_kernel,
        out_shape=jax.ShapeDtypeStruct((8, B_pad), jnp.float32),
        grid=(num_tiles,),
        in_specs=[
            pl.BlockSpec((4, tb), lambda i: (0, i)),   # x tile, batch on lanes
            const_spec(w1b), const_spec(b1),
            const_spec(w2b), const_spec(b2),
            const_spec(w3b), const_spec(b3),
            const_spec(w4p), const_spec(b4p),
        ],
        out_specs=pl.BlockSpec((8, tb), lambda i: (0, i)),
        compiler_params=pltpu.CompilerParams(
            dimension_semantics=("parallel",),
            vmem_limit_bytes=32 * 1024 * 1024),
    )(xt, w1b, b1, w2b, b2, w3b, b3, w4p, b4p)

    # Drop the padded output rows / batch columns and return (B, 3).
    # TODO(synk): if the consumer accepts (3, B) (or the raw (8, B_pad) slab), return it
    # directly to avoid this extra lane-sparse transpose pass.
    return out[:3, :B].T


def init_params(key):
    """Deterministic init mimicking nn.Linear (weight (out, in), bias (out, 1))."""
    dims = [(4, 128), (128, 64), (64, 32), (32, 3)]
    params = {}
    for i, (d_in, d_out) in enumerate(dims, start=1):
        key, kw, kb = jax.random.split(key, 3)
        bound = 1.0 / (d_in ** 0.5)  # PyTorch default U(-1/sqrt(in), 1/sqrt(in))
        params[f"w{i}"] = jax.random.uniform(
            kw, (d_out, d_in), jnp.float32, minval=-bound, maxval=bound)
        params[f"b{i}"] = jax.random.uniform(
            kb, (d_out, 1), jnp.float32, minval=-bound, maxval=bound)
    return params


def reference_forward(x, params):
    h = jnp.maximum(x @ params["w1"].T + params["b1"].T, 0.0)
    h = jnp.maximum(h @ params["w2"].T + params["b2"].T, 0.0)
    h = jnp.maximum(h @ params["w3"].T + params["b3"].T, 0.0)
    return h @ params["w4"].T + params["b4"].T


if __name__ == "__main__":
    key = jax.random.PRNGKey(0)
    key, kx = jax.random.split(key)
    batch = 8
    x = jax.random.normal(kx, (batch, 4), jnp.float32)

    params = init_params(key)

    out = dyslexia_forward(x, params)
    out = jax.block_until_ready(out)

    ref = reference_forward(x, params)
    assert out.shape == (batch, 3), out.shape
    # bf16 matmul inputs with f32 accumulation -> relaxed tolerance vs f32 reference.
    assert jnp.allclose(out, ref, atol=3e-2, rtol=3e-2), \
        f"max abs err: {jnp.max(jnp.abs(out - ref))}"

    print("KERNEL_OK")
</pallas_src>

<mosaic_0001>
module attributes {stable_mosaic.version = 11 : i64} {
  func.func @mlp_kernel(%arg0: i32, %arg1: memref<4x128xf32, #tpu.memory_space<vmem>>, %arg2: memref<128x4xbf16, #tpu.memory_space<vmem>>, %arg3: memref<128x1xf32, #tpu.memory_space<vmem>>, %arg4: memref<64x128xbf16, #tpu.memory_space<vmem>>, %arg5: memref<64x1xf32, #tpu.memory_space<vmem>>, %arg6: memref<32x64xbf16, #tpu.memory_space<vmem>>, %arg7: memref<32x1xf32, #tpu.memory_space<vmem>>, %arg8: memref<8x32xbf16, #tpu.memory_space<vmem>>, %arg9: memref<8x1xf32, #tpu.memory_space<vmem>>, %arg10: memref<8x128xf32, #tpu.memory_space<vmem>>) attributes {dimension_semantics = [#tpu.dimension_semantics<parallel>], iteration_bounds = array<i64: 1>, scalar_prefetch = 0 : i64, scratch_operands = 0 : i64, tpu.core_type = #tpu.core_type<tc>, window_params = [{transform_indices = @transform_0, window_bounds = array<i64: 4, 128>}, {pipeline_mode = #tpu.pipeline_mode<synchronous>, transform_indices = @transform_1, window_bounds = array<i64: 128, 4>}, {pipeline_mode = #tpu.pipeline_mode<synchronous>, transform_indices = @transform_2, window_bounds = array<i64: 128, 1>}, {pipeline_mode = #tpu.pipeline_mode<synchronous>, transform_indices = @transform_3, window_bounds = array<i64: 64, 128>}, {pipeline_mode = #tpu.pipeline_mode<synchronous>, transform_indices = @transform_4, window_bounds = array<i64: 64, 1>}, {pipeline_mode = #tpu.pipeline_mode<synchronous>, transform_indices = @transform_5, window_bounds = array<i64: 32, 64>}, {pipeline_mode = #tpu.pipeline_mode<synchronous>, transform_indices = @transform_6, window_bounds = array<i64: 32, 1>}, {pipeline_mode = #tpu.pipeline_mode<synchronous>, transform_indices = @transform_7, window_bounds = array<i64: 8, 32>}, {pipeline_mode = #tpu.pipeline_mode<synchronous>, transform_indices = @transform_8, window_bounds = array<i64: 8, 1>}, {transform_indices = @transform_9, window_bounds = array<i64: 8, 128>}]} {
    %c0 = arith.constant 0 : index
    %c0_0 = arith.constant 0 : index
    %0 = vector.load %arg1[%c0, %c0_0] : memref<4x128xf32, #tpu.memory_space<vmem>>, vector<4x128xf32>
    %1 = arith.truncf %0 : vector<4x128xf32> to vector<4x128xbf16>
    %c0_1 = arith.constant 0 : index
    %c0_2 = arith.constant 0 : index
    %2 = vector.load %arg2[%c0_1, %c0_2] : memref<128x4xbf16, #tpu.memory_space<vmem>>, vector<128x4xbf16>
    %cst = arith.constant dense<0.000000e+00> : vector<128x128xf32>
    %3 = tpu.matmul %2, %1, %cst {dimension_numbers = #tpu.dot_dimension_numbers<[1], [0], [0], [1], [0, 0, 1, 1], [], []>} : vector<128x4xbf16>, vector<4x128xbf16>, vector<128x128xf32> -> vector<128x128xf32>
    %c0_3 = arith.constant 0 : index
    %c0_4 = arith.constant 0 : index
    %4 = vector.load %arg3[%c0_3, %c0_4] : memref<128x1xf32, #tpu.memory_space<vmem>>, vector<128x1xf32>
    %5 = vector.broadcast %4 : vector<128x1xf32> to vector<128x128xf32>
    %6 = arith.addf %3, %5 : vector<128x128xf32>
    %cst_5 = arith.constant 0.000000e+00 : f32
    %7 = vector.broadcast %cst_5 : f32 to vector<128x128xf32>
    %8 = arith.maximumf %6, %7 : vector<128x128xf32>
    %9 = arith.truncf %8 : vector<128x128xf32> to vector<128x128xbf16>
    %c0_6 = arith.constant 0 : index
    %c0_7 = arith.constant 0 : index
    %10 = vector.load %arg4[%c0_6, %c0_7] : memref<64x128xbf16, #tpu.memory_space<vmem>>, vector<64x128xbf16>
    %cst_8 = arith.constant dense<0.000000e+00> : vector<64x128xf32>
    %11 = tpu.matmul %10, %9, %cst_8 {dimension_numbers = #tpu.dot_dimension_numbers<[1], [0], [0], [1], [0, 0, 1, 1], [], []>} : vector<64x128xbf16>, vector<128x128xbf16>, vector<64x128xf32> -> vector<64x128xf32>
    %c0_9 = arith.constant 0 : index
    %c0_10 = arith.constant 0 : index
    %12 = vector.load %arg5[%c0_9, %c0_10] : memref<64x1xf32, #tpu.memory_space<vmem>>, vector<64x1xf32>
    %13 = vector.broadcast %12 : vector<64x1xf32> to vector<64x128xf32>
    %14 = arith.addf %11, %13 : vector<64x128xf32>
    %cst_11 = arith.constant 0.000000e+00 : f32
    %15 = vector.broadcast %cst_11 : f32 to vector<64x128xf32>
    %16 = arith.maximumf %14, %15 : vector<64x128xf32>
    %17 = arith.truncf %16 : vector<64x128xf32> to vector<64x128xbf16>
    %c0_12 = arith.constant 0 : index
    %c0_13 = arith.constant 0 : index
    %18 = vector.load %arg6[%c0_12, %c0_13] : memref<32x64xbf16, #tpu.memory_space<vmem>>, vector<32x64xbf16>
    %cst_14 = arith.constant dense<0.000000e+00> : vector<32x128xf32>
    %19 = tpu.matmul %18, %17, %cst_14 {dimension_numbers = #tpu.dot_dimension_numbers<[1], [0], [0], [1], [0, 0, 1, 1], [], []>} : vector<32x64xbf16>, vector<64x128xbf16>, vector<32x128xf32> -> vector<32x128xf32>
    %c0_15 = arith.constant 0 : index
    %c0_16 = arith.constant 0 : index
    %20 = vector.load %arg7[%c0_15, %c0_16] : memref<32x1xf32, #tpu.memory_space<vmem>>, vector<32x1xf32>
    %21 = vector.broadcast %20 : vector<32x1xf32> to vector<32x128xf32>
    %22 = arith.addf %19, %21 : vector<32x128xf32>
    %cst_17 = arith.constant 0.000000e+00 : f32
    %23 = vector.broadcast %cst_17 : f32 to vector<32x128xf32>
    %24 = arith.maximumf %22, %23 : vector<32x128xf32>
    %25 = arith.truncf %24 : vector<32x128xf32> to vector<32x128xbf16>
    %c0_18 = arith.constant 0 : index
    %c0_19 = arith.constant 0 : index
    %26 = vector.load %arg8[%c0_18, %c0_19] : memref<8x32xbf16, #tpu.memory_space<vmem>>, vector<8x32xbf16>
    %cst_20 = arith.constant dense<0.000000e+00> : vector<8x128xf32>
    %27 = tpu.matmul %26, %25, %cst_20 {dimension_numbers = #tpu.dot_dimension_numbers<[1], [0], [0], [1], [0, 0, 1, 1], [], []>} : vector<8x32xbf16>, vector<32x128xbf16>, vector<8x128xf32> -> vector<8x128xf32>
    %c0_21 = arith.constant 0 : index
    %c0_22 = arith.constant 0 : index
    %28 = vector.load %arg9[%c0_21, %c0_22] : memref<8x1xf32, #tpu.memory_space<vmem>>, vector<8x1xf32>
    %29 = vector.broadcast %28 : vector<8x1xf32> to vector<8x128xf32>
    %30 = arith.addf %27, %29 : vector<8x128xf32>
    %c0_23 = arith.constant 0 : index
    %c0_24 = arith.constant 0 : index
    %31 = vector.load %arg10[%c0_23, %c0_24] : memref<8x128xf32, #tpu.memory_space<vmem>>, vector<8x128xf32>
    tpu.vector_store %arg10[%c0_23, %c0_24], %30 {strides = array<i32>} : memref<8x128xf32, #tpu.memory_space<vmem>>, vector<8x128xf32>,
    return
  }
  func.func @transform_0(%arg0: i32) -> (i32, i32) {
    %c0_i32 = arith.constant 0 : i32
    %c0_i32_0 = arith.constant 0 : i32
    return %c0_i32, %arg0 : i32, i32
  }
  func.func @transform_1(%arg0: i32) -> (i32, i32) {
    %c0_i32 = arith.constant 0 : i32
    %c0_i32_0 = arith.constant 0 : i32
    %c0_i32_1 = arith.constant 0 : i32
    return %c0_i32, %c0_i32_0 : i32, i32
  }
  func.func @transform_2(%arg0: i32) -> (i32, i32) {
    %c0_i32 = arith.constant 0 : i32
    %c0_i32_0 = arith.constant 0 : i32
    %c0_i32_1 = arith.constant 0 : i32
    return %c0_i32, %c0_i32_0 : i32, i32
  }
  func.func @transform_3(%arg0: i32) -> (i32, i32) {
    %c0_i32 = arith.constant 0 : i32
    %c0_i32_0 = arith.constant 0 : i32
    %c0_i32_1 = arith.constant 0 : i32
    return %c0_i32, %c0_i32_0 : i32, i32
  }
  func.func @transform_4(%arg0: i32) -> (i32, i32) {
    %c0_i32 = arith.constant 0 : i32
    %c0_i32_0 = arith.constant 0 : i32
    %c0_i32_1 = arith.constant 0 : i32
    return %c0_i32, %c0_i32_0 : i32, i32
  }
  func.func @transform_5(%arg0: i32) -> (i32, i32) {
    %c0_i32 = arith.constant 0 : i32
    %c0_i32_0 = arith.constant 0 : i32
    %c0_i32_1 = arith.constant 0 : i32
    return %c0_i32, %c0_i32_0 : i32, i32
  }
  func.func @transform_6(%arg0: i32) -> (i32, i32) {
    %c0_i32 = arith.constant 0 : i32
    %c0_i32_0 = arith.constant 0 : i32
    %c0_i32_1 = arith.constant 0 : i32
    return %c0_i32, %c0_i32_0 : i32, i32
  }
  func.func @transform_7(%arg0: i32) -> (i32, i32) {
    %c0_i32 = arith.constant 0 : i32
    %c0_i32_0 = arith.constant 0 : i32
    %c0_i32_1 = arith.constant 0 : i32
    return %c0_i32, %c0_i32_0 : i32, i32
  }
  func.func @transform_8(%arg0: i32) -> (i32, i32) {
    %c0_i32 = arith.constant 0 : i32
    %c0_i32_0 = arith.constant 0 : i32
    %c0_i32_1 = arith.constant 0 : i32
    return %c0_i32, %c0_i32_0 : i32, i32
  }
  func.func @transform_9(%arg0: i32) -> (i32, i32) {
    %c0_i32 = arith.constant 0 : i32
    %c0_i32_0 = arith.constant 0 : i32
    return %c0_i32, %arg0 : i32, i32
  }
}

</mosaic_0001>

<llo_original>
// kernel: tpu_custom_call.1
$region0: #{tpu_custom_call.1}
  #allocation0 [shape = 'u32[]', space=smem, size = 0x4, offset = 0x4, fixed_abs, tag = 'smem constant byte address 0x4 - core index']
  #allocation1 [shape = 'u32[144,128]{1,0:T(1,128)}', space=vmem, size = 0x12000, scoped, tag = 'internal scratch']
  %s0 = inlined_call_operand.vmem [shape: f32[4,128], index: 0, kind: input, shape index: {}]
  %s1 = inlined_call_operand.vmem [shape: bf16[128,4], index: 1, kind: input, shape index: {}]
  %s2 = inlined_call_operand.vmem [shape: f32[128,1], index: 2, kind: input, shape index: {}]
  %s3 = inlined_call_operand.vmem [shape: bf16[64,128], index: 3, kind: input, shape index: {}]
  %s4 = inlined_call_operand.vmem [shape: f32[64,1], index: 4, kind: input, shape index: {}]
  %s5 = inlined_call_operand.vmem [shape: bf16[32,64], index: 5, kind: input, shape index: {}]
  %s6 = inlined_call_operand.vmem [shape: f32[32,1], index: 6, kind: input, shape index: {}]
  %s7 = inlined_call_operand.vmem [shape: bf16[8,32], index: 7, kind: input, shape index: {}]
  %s8 = inlined_call_operand.vmem [shape: f32[8,1], index: 8, kind: input, shape index: {}]
  %s9 = inlined_call_operand.hbm [shape: f32[8,128], index: 9, kind: output, shape index: {}]
  %s10 = sld [smem:[#allocation0]]
  $region46: #{tpu_custom_call.1} parent=0
    _
  %s12 = ssub.s32 1, %s10
  %s13 = scalar_select 0, %s12, %s10
  $region1: #{tpu_custom_call.1} parent=0
    #allocation2 [shape = 'u8[4096]{0}', space=vmem, size = 0x1000, scoped, tag = 'output window, operand 0, single buffered']
    #allocation3 [shape = 's32[1]{0}', space=sflag, size = 0x4, scoped, tag = 'scoped memory for tpu_custom_call.1']
    %14 = vsyncpa [#allocation3], 0
    // Predicated region
    $region2: #{tpu_custom_call.1} parent=1 // pred_check
      _
    $region3: #{tpu_custom_call.1} parent=1 // pred_check_branch
      %16 = sbr.rel (0) target = $region5
    $region4: #{tpu_custom_call.1} parent=1 // pred_region
      _
    $region5: #{tpu_custom_call.1} parent=1 // pred_fallthru
      _
    // Predicated region
    $region6: #{tpu_custom_call.1} parent=1 // pred_check
      _
    $region7: #{tpu_custom_call.1} parent=1 // pred_check_branch
      %18 = sbr.rel (0) target = $region9
    $region8: #{tpu_custom_call.1} parent=1 // pred_region
      _
    $region9: #{tpu_custom_call.1} parent=1 // pred_fallthru
      _
    // Predicated region
    $region10: #{tpu_custom_call.1} parent=1 // pred_check
      _
    $region11: #{tpu_custom_call.1} parent=1 // pred_check_branch
      %20 = sbr.rel (0) target = $region13
    $region12: #{tpu_custom_call.1} parent=1 // pred_region
      _
    $region13: #{tpu_custom_call.1} parent=1 // pred_fallthru
      _
    // Predicated region
    $region14: #{tpu_custom_call.1} parent=1 // pred_check
      _
    $region15: #{tpu_custom_call.1} parent=1 // pred_check_branch
      %22 = sbr.rel (0) target = $region17
    $region16: #{tpu_custom_call.1} parent=1 // pred_region
      _
    $region17: #{tpu_custom_call.1} parent=1 // pred_fallthru
      _
    // Predicated region
    $region18: #{tpu_custom_call.1} parent=1 // pred_check
      _
    $region19: #{tpu_custom_call.1} parent=1 // pred_check_branch
      %24 = sbr.rel (0) target = $region21
    $region20: #{tpu_custom_call.1} parent=1 // pred_region
      _
    $region21: #{tpu_custom_call.1} parent=1 // pred_fallthru
      _
    // Predicated region
    $region22: #{tpu_custom_call.1} parent=1 // pred_check
      _
    $region23: #{tpu_custom_call.1} parent=1 // pred_check_branch
      %26 = sbr.rel (0) target = $region25
    $region24: #{tpu_custom_call.1} parent=1 // pred_region
      _
    $region25: #{tpu_custom_call.1} parent=1 // pred_fallthru
      _
    // Predicated region
    $region26: #{tpu_custom_call.1} parent=1 // pred_check
      _
    $region27: #{tpu_custom_call.1} parent=1 // pred_check_branch
      %28 = sbr.rel (0) target = $region29
    $region28: #{tpu_custom_call.1} parent=1 // pred_region
      _
    $region29: #{tpu_custom_call.1} parent=1 // pred_fallthru
      _
    // Predicated region
    $region30: #{tpu_custom_call.1} parent=1 // pred_check
      _
    $region31: #{tpu_custom_call.1} parent=1 // pred_check_branch
      %30 = sbr.rel (0) target = $region33
    $region32: #{tpu_custom_call.1} parent=1 // pred_region
      _
    $region33: #{tpu_custom_call.1} parent=1 // pred_fallthru
      _
    // Predicated region
    $region34: #{tpu_custom_call.1} parent=1 // pred_check
      _
    $region35: #{tpu_custom_call.1} parent=1 // pred_check_branch
      %32 = sbr.rel (0) target = $region37
    $region36: #{tpu_custom_call.1} parent=1 // pred_region
      _
    $region37: #{tpu_custom_call.1} parent=1 // pred_fallthru
      _
    %v34 = vld [vmem:[%s0] sm:$0xf]
    %v35 = vpack.c.bf16 %v34, %v34
    %v36 = vld [vmem:[%s1] sm:$0xf]
    %v37 = vld [vmem:[%s1 + $0x4] sm:$0xf]
    %v38 = vld [vmem:[%s1 + $0x8] sm:$0xf]
    %v39 = vld [vmem:[%s1 + $0xc] sm:$0xf]
    %v40 = vld [vmem:[%s1 + $0x10] sm:$0xf]
    %v41 = vld [vmem:[%s1 + $0x14] sm:$0xf]
    %v42 = vld [vmem:[%s1 + $0x18] sm:$0xf]
    %v43 = vld [vmem:[%s1 + $0x1c] sm:$0xf]
    %v44 = vld [vmem:[%s1 + $0x20] sm:$0xf]
    %v45 = vld [vmem:[%s1 + $0x24] sm:$0xf]
    %v46 = vld [vmem:[%s1 + $0x28] sm:$0xf]
    %v47 = vld [vmem:[%s1 + $0x2c] sm:$0xf]
    %v48 = vld [vmem:[%s1 + $0x30] sm:$0xf]
    %v49 = vld [vmem:[%s1 + $0x34] sm:$0xf]
    %v50 = vld [vmem:[%s1 + $0x38] sm:$0xf]
    %v51 = vld [vmem:[%s1 + $0x3c] sm:$0xf]
    %v52 = vld [vmem:[%s2] sm:$0xff]
    %v53 = vld [vmem:[%s2 + $0x8] sm:$0xff]
    %v54 = vld [vmem:[%s2 + $0x10] sm:$0xff]
    %v55 = vld [vmem:[%s2 + $0x18] sm:$0xff]
    %v56 = vld [vmem:[%s2 + $0x20] sm:$0xff]
    %v57 = vld [vmem:[%s2 + $0x28] sm:$0xff]
    %v58 = vld [vmem:[%s2 + $0x30] sm:$0xff]
    %v59 = vld [vmem:[%s2 + $0x38] sm:$0xff]
    %v60 = vld [vmem:[%s2 + $0x40] sm:$0xff]
    %v61 = vld [vmem:[%s2 + $0x48] sm:$0xff]
    %v62 = vld [vmem:[%s2 + $0x50] sm:$0xff]
    %v63 = vld [vmem:[%s2 + $0x58] sm:$0xff]
    %v64 = vld [vmem:[%s2 + $0x60] sm:$0xff]
    %v65 = vld [vmem:[%s2 + $0x68] sm:$0xff]
    %v66 = vld [vmem:[%s2 + $0x70] sm:$0xff]
    %v67 = vld [vmem:[%s2 + $0x78] sm:$0xff]
    %69 = vset.pattern.permute.xlu0 0
    %70 = vperm.xlu0 %69, %v52
    %v71 = vpop.permute.xlu0 %70
    %74 = vset.pattern.permute.xlu0 0
    %75 = vperm.xlu0 %74, %v53
    %v76 = vpop.permute.xlu0 %75
    %79 = vset.pattern.permute.xlu0 0
    %80 = vperm.xlu0 %79, %v54
    %v81 = vpop.permute.xlu0 %80
    %84 = vset.pattern.permute.xlu0 0
    %85 = vperm.xlu0 %84, %v55
    %v86 = vpop.permute.xlu0 %85
    %89 = vset.pattern.permute.xlu0 0
    %90 = vperm.xlu0 %89, %v56
    %v91 = vpop.permute.xlu0 %90
    %94 = vset.pattern.permute.xlu0 0
    %95 = vperm.xlu0 %94, %v57
    %v96 = vpop.permute.xlu0 %95
    %99 = vset.pattern.permute.xlu0 0
    %100 = vperm.xlu0 %99, %v58
    %v101 = vpop.permute.xlu0 %100
    %104 = vset.pattern.permute.xlu0 0
    %105 = vperm.xlu0 %104, %v59
    %v106 = vpop.permute.xlu0 %105
    %109 = vset.pattern.permute.xlu0 0
    %110 = vperm.xlu0 %109, %v60
    %v111 = vpop.permute.xlu0 %110
    %114 = vset.pattern.permute.xlu0 0
    %115 = vperm.xlu0 %114, %v61
    %v116 = vpop.permute.xlu0 %115
    %119 = vset.pattern.permute.xlu0 0
    %120 = vperm.xlu0 %119, %v62
    %v121 = vpop.permute.xlu0 %120
    %124 = vset.pattern.permute.xlu0 0
    %125 = vperm.xlu0 %124, %v63
    %v126 = vpop.permute.xlu0 %125
    %129 = vset.pattern.permute.xlu0 0
    %130 = vperm.xlu0 %129, %v64
    %v131 = vpop.permute.xlu0 %130
    %134 = vset.pattern.permute.xlu0 0
    %135 = vperm.xlu0 %134, %v65
    %v136 = vpop.permute.xlu0 %135
    %139 = vset.pattern.permute.xlu0 0
    %140 = vperm.xlu0 %139, %v66
    %v141 = vpop.permute.xlu0 %140
    %144 = vset.pattern.permute.xlu0 0
    %145 = vperm.xlu0 %144, %v67
    %v146 = vpop.permute.xlu0 %145
    %v164 = vunpack.c.l.b16 %v36
    %v165 = vunpack.c.l.b16 %v37
    %v166 = vunpack.c.l.b16 %v38
    %v167 = vunpack.c.l.b16 %v39
    %v168 = vunpack.c.l.b16 %v40
    %v169 = vunpack.c.l.b16 %v41
    %v170 = vunpack.c.l.b16 %v42
    %v171 = vunpack.c.l.b16 %v43
    %v172 = vunpack.c.l.b16 %v44
    %v173 = vunpack.c.l.b16 %v45
    %v174 = vunpack.c.l.b16 %v46
    %v175 = vunpack.c.l.b16 %v47
    %v176 = vunpack.c.l.b16 %v48
    %v177 = vunpack.c.l.b16 %v49
    %v178 = vunpack.c.l.b16 %v50
    %v179 = vunpack.c.l.b16 %v51
    %v180 = vpack.c.b16 %v165, %v164
    %v181 = vpack.c.b16 %v167, %v166
    %v182 = vpack.c.b16 %v169, %v168
    %v183 = vpack.c.b16 %v171, %v170
    %v184 = vpack.c.b16 %v173, %v172
    %v185 = vpack.c.b16 %v175, %v174
    %v186 = vpack.c.b16 %v177, %v176
    %v187 = vpack.c.b16 %v179, %v178
    %vm188 = vcmask 31744
    %v190 = vsel %vm188, %v180, 0
    %v193 = vsel %vm188, %v181, 0
    %v196 = vsel %vm188, %v182, 0
    %v199 = vsel %vm188, %v183, 0
    %v202 = vsel %vm188, %v184, 0
    %v205 = vsel %vm188, %v185, 0
    %v208 = vsel %vm188, %v186, 0
    %v211 = vsel %vm188, %v187, 0
    %vm213 = vcmask 1041408
    %v215 = vsel %vm213, %v35, 0
    %217 = vmatprep.subr.bf16.mxu0 0
    %218 = vmatpush1.bf16.msra.mxu0 %v215
    %219 = vmatprep.subr.bf16.mxu0 0
    %220 = vmatpush1.bf16.msra.mxu0 0
    %221 = vmatprep.subr.bf16.mxu0 0
    %222 = vmatpush1.bf16.msra.mxu0 0
    %223 = vmatprep.subr.bf16.mxu0 0
    %224 = vmatpush1.bf16.msra.mxu0 0
    %225 = vmatprep.subr.bf16.mxu0 0
    %226 = vmatpush1.bf16.msra.mxu0 0
    %227 = vmatprep.subr.bf16.mxu0 0
    %228 = vmatpush1.bf16.msra.mxu0 0
    %229 = vmatprep.subr.bf16.mxu0 0
    %230 = vmatpush1.bf16.msra.mxu0 0
    %231 = vmatprep.subr.bf16.mxu0 0
    %232 = vmatpush1.bf16.msra.mxu0 0
    %233 = vmatprep.subr.bf16.mxu0 0
    %234 = vmatpush1.bf16.msra.mxu0 0
    %235 = vmatprep.subr.bf16.mxu0 0
    %236 = vmatpush1.bf16.msra.mxu0 0
    %237 = vmatprep.subr.bf16.mxu0 0
    %238 = vmatpush1.bf16.msra.mxu0 0
    %239 = vmatprep.subr.bf16.mxu0 0
    %240 = vmatpush1.bf16.msra.mxu0 0
    %241 = vmatprep.subr.bf16.mxu0 0
    %242 = vmatpush1.bf16.msra.mxu0 0
    %243 = vmatprep.subr.bf16.mxu0 0
    %244 = vmatpush1.bf16.msra.mxu0 0
    %245 = vmatprep.subr.bf16.mxu0 0
    %246 = vmatpush1.bf16.msra.mxu0 0
    %247 = vmatprep.subr.bf16.mxu0 0
    %248 = vmatpush1.bf16.msra.mxu0 0
    %249 = vmatprep.mubr.bf16.mxu0 0
    %250 = vmatmul.mubr.bf16.gmra.mrb[0].mxu0 %v190
    %v251 = vpop.f32.mrb[0].mxu0
    %v252 = vadd.f32 %v71, %v251
    %v253 = vpop.f32.mrb[0].mxu0
    %v254 = vpop.f32.mrb[0].mxu0
    %v255 = vadd.f32 %v76, %v254
    %v256 = vpop.f32.mrb[0].mxu0
    %257 = vmatprep.mubr.bf16.mxu0 0
    %258 = vmatmul.mubr.bf16.gmra.mrb[0].mxu0 %v193
    %v259 = vpop.f32.mrb[0].mxu0
    %v260 = vadd.f32 %v81, %v259
    %v261 = vpop.f32.mrb[0].mxu0
    %v262 = vpop.f32.mrb[0].mxu0
    %v263 = vadd.f32 %v86, %v262
    %v264 = vpop.f32.mrb[0].mxu0
    %265 = vmatprep.mubr.bf16.mxu0 0
    %266 = vmatmul.mubr.bf16.gmra.mrb[0].mxu0 %v196
    %v267 = vpop.f32.mrb[0].mxu0
    %v268 = vadd.f32 %v91, %v267
    %v269 = vpop.f32.mrb[0].mxu0
    %v270 = vpop.f32.mrb[0].mxu0
    %v271 = vadd.f32 %v96, %v270
    %v272 = vpop.f32.mrb[0].mxu0
    %273 = vmatprep.mubr.bf16.mxu0 0
    %274 = vmatmul.mubr.bf16.gmra.mrb[0].mxu0 %v199
    %v275 = vpop.f32.mrb[0].mxu0
    %v276 = vadd.f32 %v101, %v275
    %v277 = vpop.f32.mrb[0].mxu0
    %v278 = vpop.f32.mrb[0].mxu0
    %v279 = vadd.f32 %v106, %v278
    %v280 = vpop.f32.mrb[0].mxu0
    %281 = vmatprep.mubr.bf16.mxu0 0
    %282 = vmatmul.mubr.bf16.gmra.mrb[0].mxu0 %v202
    %v283 = vpop.f32.mrb[0].mxu0
    %v284 = vadd.f32 %v111, %v283
    %v285 = vpop.f32.mrb[0].mxu0
    %v286 = vpop.f32.mrb[0].mxu0
    %v287 = vadd.f32 %v116, %v286
    %v288 = vpop.f32.mrb[0].mxu0
    %289 = vmatprep.mubr.bf16.mxu0 0
    %290 = vmatmul.mubr.bf16.gmra.mrb[0].mxu0 %v205
    %v291 = vpop.f32.mrb[0].mxu0
    %v292 = vadd.f32 %v121, %v291
    %v293 = vpop.f32.mrb[0].mxu0
    %v294 = vpop.f32.mrb[0].mxu0
    %v295 = vadd.f32 %v126, %v294
    %v296 = vpop.f32.mrb[0].mxu0
    %297 = vmatprep.mubr.bf16.mxu0 0
    %298 = vmatmul.mubr.bf16.gmra.mrb[0].mxu0 %v208
    %v299 = vpop.f32.mrb[0].mxu0
    %v300 = vadd.f32 %v131, %v299
    %v301 = vpop.f32.mrb[0].mxu0
    %v302 = vpop.f32.mrb[0].mxu0
    %v303 = vadd.f32 %v136, %v302
    %v304 = vpop.f32.mrb[0].mxu0
    %305 = vmatprep.mubr.bf16.mxu0 0
    %306 = vmatmul.mubr.bf16.gmra.mrb[0].mxu0 %v211
    %v307 = vpop.f32.mrb[0].mxu0
    %v308 = vadd.f32 %v141, %v307
    %v309 = vpop.f32.mrb[0].mxu0
    %v310 = vpop.f32.mrb[0].mxu0
    %v311 = vadd.f32 %v146, %v310
    %v312 = vpop.f32.mrb[0].mxu0
    %313 = vdwg.mxu0
    %v314 = vmax.f32 %v252, 0.0
    %v315 = vmax.f32 %v255, 0.0
    %v316 = vmax.f32 %v260, 0.0
    %v317 = vmax.f32 %v263, 0.0
    %v318 = vmax.f32 %v268, 0.0
    %v319 = vmax.f32 %v271, 0.0
    %v320 = vmax.f32 %v276, 0.0
    %v321 = vmax.f32 %v279, 0.0
    %v322 = vmax.f32 %v284, 0.0
    %v323 = vmax.f32 %v287, 0.0
    %v324 = vmax.f32 %v292, 0.0
    %v325 = vmax.f32 %v295, 0.0
    %v326 = vmax.f32 %v300, 0.0
    %v327 = vmax.f32 %v303, 0.0
    %v328 = vmax.f32 %v308, 0.0
    %v329 = vmax.f32 %v311, 0.0
    %v330 = vpack.c.bf16 %v315, %v314
    %v331 = vpack.c.bf16 %v317, %v316
    %v332 = vpack.c.bf16 %v319, %v318
    %v333 = vpack.c.bf16 %v321, %v320
    %v334 = vpack.c.bf16 %v323, %v322
    %v335 = vpack.c.bf16 %v325, %v324
    %v336 = vpack.c.bf16 %v327, %v326
    %v337 = vpack.c.bf16 %v329, %v328
    %v338 = vld [vmem:[%s3] sm:$0xf]
    %v339 = vld [vmem:[%s3 + $0x4] sm:$0xf]
    %v340 = vld [vmem:[%s3 + $0x8] sm:$0xf]
    %v341 = vld [vmem:[%s3 + $0xc] sm:$0xf]
    %v342 = vld [vmem:[%s3 + $0x10] sm:$0xf]
    %v343 = vld [vmem:[%s3 + $0x14] sm:$0xf]
    %v344 = vld [vmem:[%s3 + $0x18] sm:$0xf]
    %v345 = vld [vmem:[%s3 + $0x1c] sm:$0xf]
    %v346 = vld [vmem:[%s4] sm:$0xff]
    %v347 = vld [vmem:[%s4 + $0x8] sm:$0xff]
    %v348 = vld [vmem:[%s4 + $0x10] sm:$0xff]
    %v349 = vld [vmem:[%s4 + $0x18] sm:$0xff]
    %v350 = vld [vmem:[%s4 + $0x20] sm:$0xff]
    %v351 = vld [vmem:[%s4 + $0x28] sm:$0xff]
    %v352 = vld [vmem:[%s4 + $0x30] sm:$0xff]
    %v353 = vld [vmem:[%s4 + $0x38] sm:$0xff]
    %355 = vset.pattern.permute.xlu0 0
    %356 = vperm.xlu0 %355, %v346
    %v357 = vpop.permute.xlu0 %356
    %360 = vset.pattern.permute.xlu0 0
    %361 = vperm.xlu0 %360, %v347
    %v362 = vpop.permute.xlu0 %361
    %365 = vset.pattern.permute.xlu0 0
    %366 = vperm.xlu0 %365, %v348
    %v367 = vpop.permute.xlu0 %366
    %370 = vset.pattern.permute.xlu0 0
    %371 = vperm.xlu0 %370, %v349
    %v372 = vpop.permute.xlu0 %371
    %375 = vset.pattern.permute.xlu0 0
    %376 = vperm.xlu0 %375, %v350
    %v377 = vpop.permute.xlu0 %376
    %380 = vset.pattern.permute.xlu0 0
    %381 = vperm.xlu0 %380, %v351
    %v382 = vpop.permute.xlu0 %381
    %385 = vset.pattern.permute.xlu0 0
    %386 = vperm.xlu0 %385, %v352
    %v387 = vpop.permute.xlu0 %386
    %390 = vset.pattern.permute.xlu0 0
    %391 = vperm.xlu0 %390, %v353
    %v392 = vpop.permute.xlu0 %391
    %v402 = vunpack.c.l.b16 %v338
    %v403 = vunpack.c.l.b16 %v339
    %v404 = vunpack.c.l.b16 %v340
    %v405 = vunpack.c.l.b16 %v341
    %v406 = vunpack.c.l.b16 %v342
    %v407 = vunpack.c.l.b16 %v343
    %v408 = vunpack.c.l.b16 %v344
    %v409 = vunpack.c.l.b16 %v345
    %v410 = vpack.c.b16 %v403, %v402
    %v411 = vpack.c.b16 %v405, %v404
    %v412 = vpack.c.b16 %v407, %v406
    %v413 = vpack.c.b16 %v409, %v408
    %418 = vmatprep.subr.bf16.mxu0 0
    %419 = vmatpush1.bf16.msra.mxu0 %v330
    %420 = vmatprep.subr.bf16.mxu0 0
    %421 = vmatpush1.bf16.msra.mxu0 %v331
    %422 = vmatprep.subr.bf16.mxu0 0
    %423 = vmatpush1.bf16.msra.mxu0 %v332
    %424 = vmatprep.subr.bf16.mxu0 0
    %425 = vmatpush1.bf16.msra.mxu0 %v333
    %426 = vmatprep.subr.bf16.mxu0 0
    %427 = vmatpush1.bf16.msra.mxu0 %v334
    %428 = vmatprep.subr.bf16.mxu0 0
    %429 = vmatpush1.bf16.msra.mxu0 %v335
    %430 = vmatprep.subr.bf16.mxu0 0
    %431 = vmatpush1.bf16.msra.mxu0 %v336
    %432 = vmatprep.subr.bf16.mxu0 0
    %433 = vmatpush1.bf16.msra.mxu0 %v337
    %434 = vmatprep.subr.bf16.mxu0 0
    %435 = vmatpush1.bf16.msra.mxu0 0
    %436 = vmatprep.subr.bf16.mxu0 0
    %437 = vmatpush1.bf16.msra.mxu0 0
    %438 = vmatprep.subr.bf16.mxu0 0
    %439 = vmatpush1.bf16.msra.mxu0 0
    %440 = vmatprep.subr.bf16.mxu0 0
    %441 = vmatpush1.bf16.msra.mxu0 0
    %442 = vmatprep.subr.bf16.mxu0 0
    %443 = vmatpush1.bf16.msra.mxu0 0
    %444 = vmatprep.subr.bf16.mxu0 0
    %445 = vmatpush1.bf16.msra.mxu0 0
    %446 = vmatprep.subr.bf16.mxu0 0
    %447 = vmatpush1.bf16.msra.mxu0 0
    %448 = vmatprep.subr.bf16.mxu0 0
    %449 = vmatpush1.bf16.msra.mxu0 0
    %450 = vmatprep.mubr.bf16.mxu0 0
    %451 = vmatmul.mubr.bf16.gmra.mrb[0].mxu0 %v410
    %v452 = vpop.f32.mrb[0].mxu0
    %v453 = vadd.f32 %v357, %v452
    %v454 = vpop.f32.mrb[0].mxu0
    %v455 = vpop.f32.mrb[0].mxu0
    %v456 = vadd.f32 %v362, %v455
    %v457 = vpop.f32.mrb[0].mxu0
    %458 = vmatprep.mubr.bf16.mxu0 0
    %459 = vmatmul.mubr.bf16.gmra.mrb[0].mxu0 %v411
    %v460 = vpop.f32.mrb[0].mxu0
    %v461 = vadd.f32 %v367, %v460
    %v462 = vpop.f32.mrb[0].mxu0
    %v463 = vpop.f32.mrb[0].mxu0
    %v464 = vadd.f32 %v372, %v463
    %v465 = vpop.f32.mrb[0].mxu0
    %466 = vmatprep.mubr.bf16.mxu0 0
    %467 = vmatmul.mubr.bf16.gmra.mrb[0].mxu0 %v412
    %v468 = vpop.f32.mrb[0].mxu0
    %v469 = vadd.f32 %v377, %v468
    %v470 = vpop.f32.mrb[0].mxu0
    %v471 = vpop.f32.mrb[0].mxu0
    %v472 = vadd.f32 %v382, %v471
    %v473 = vpop.f32.mrb[0].mxu0
    %474 = vmatprep.mubr.bf16.mxu0 0
    %475 = vmatmul.mubr.bf16.gmra.mrb[0].mxu0 %v413
    %v476 = vpop.f32.mrb[0].mxu0
    %v477 = vadd.f32 %v387, %v476
    %v478 = vpop.f32.mrb[0].mxu0
    %v479 = vpop.f32.mrb[0].mxu0
    %v480 = vadd.f32 %v392, %v479
    %v481 = vpop.f32.mrb[0].mxu0
    %482 = vdwg.mxu0
    %v483 = vmax.f32 %v453, 0.0
    %v484 = vmax.f32 %v456, 0.0
    %v485 = vmax.f32 %v461, 0.0
    %v486 = vmax.f32 %v464, 0.0
    %v487 = vmax.f32 %v469, 0.0
    %v488 = vmax.f32 %v472, 0.0
    %v489 = vmax.f32 %v477, 0.0
    %v490 = vmax.f32 %v480, 0.0
    %v491 = vpack.c.bf16 %v484, %v483
    %v492 = vpack.c.bf16 %v486, %v485
    %v493 = vpack.c.bf16 %v488, %v487
    %v494 = vpack.c.bf16 %v490, %v489
    %v495 = vld [vmem:[%s5] sm:$0xf]
    %v496 = vld [vmem:[%s5 + $0x4] sm:$0xf]
    %v497 = vld [vmem:[%s5 + $0x8] sm:$0xf]
    %v498 = vld [vmem:[%s5 + $0xc] sm:$0xf]
    %v499 = vld [vmem:[%s6] sm:$0xff]
    %v500 = vld [vmem:[%s6 + $0x8] sm:$0xff]
    %v501 = vld [vmem:[%s6 + $0x10] sm:$0xff]
    %v502 = vld [vmem:[%s6 + $0x18] sm:$0xff]
    %504 = vset.pattern.permute.xlu0 0
    %505 = vperm.xlu0 %504, %v499
    %v506 = vpop.permute.xlu0 %505
    %509 = vset.pattern.permute.xlu0 0
    %510 = vperm.xlu0 %509, %v500
    %v511 = vpop.permute.xlu0 %510
    %514 = vset.pattern.permute.xlu0 0
    %515 = vperm.xlu0 %514, %v501
    %v516 = vpop.permute.xlu0 %515
    %519 = vset.pattern.permute.xlu0 0
    %520 = vperm.xlu0 %519, %v502
    %v521 = vpop.permute.xlu0 %520
    %v527 = vunpack.c.l.b16 %v495
    %v528 = vunpack.c.l.b16 %v496
    %v529 = vunpack.c.l.b16 %v497
    %v530 = vunpack.c.l.b16 %v498
    %v531 = vpack.c.b16 %v528, %v527
    %v532 = vpack.c.b16 %v530, %v529
    %vm533 = vcmask 523264
    %v535 = vsel %vm533, %v531, 0
    %v538 = vsel %vm533, %v532, 0
    %540 = vmatprep.subr.bf16.mxu0 0
    %541 = vmatpush1.bf16.msra.mxu0 %v491
    %542 = vmatprep.subr.bf16.mxu0 0
    %543 = vmatpush1.bf16.msra.mxu0 %v492
    %544 = vmatprep.subr.bf16.mxu0 0
    %545 = vmatpush1.bf16.msra.mxu0 %v493
    %546 = vmatprep.subr.bf16.mxu0 0
    %547 = vmatpush1.bf16.msra.mxu0 %v494
    %548 = vmatprep.subr.bf16.mxu0 0
    %549 = vmatpush1.bf16.msra.mxu0 0
    %550 = vmatprep.subr.bf16.mxu0 0
    %551 = vmatpush1.bf16.msra.mxu0 0
    %552 = vmatprep.subr.bf16.mxu0 0
    %553 = vmatpush1.bf16.msra.mxu0 0
    %554 = vmatprep.subr.bf16.mxu0 0
    %555 = vmatpush1.bf16.msra.mxu0 0
    %556 = vmatprep.subr.bf16.mxu0 0
    %557 = vmatpush1.bf16.msra.mxu0 0
    %558 = vmatprep.subr.bf16.mxu0 0
    %559 = vmatpush1.bf16.msra.mxu0 0
    %560 = vmatprep.subr.bf16.mxu0 0
    %561 = vmatpush1.bf16.msra.mxu0 0
    %562 = vmatprep.subr.bf16.mxu0 0
    %563 = vmatpush1.bf16.msra.mxu0 0
    %564 = vmatprep.subr.bf16.mxu0 0
    %565 = vmatpush1.bf16.msra.mxu0 0
    %566 = vmatprep.subr.bf16.mxu0 0
    %567 = vmatpush1.bf16.msra.mxu0 0
    %568 = vmatprep.subr.bf16.mxu0 0
    %569 = vmatpush1.bf16.msra.mxu0 0
    %570 = vmatprep.subr.bf16.mxu0 0
    %571 = vmatpush1.bf16.msra.mxu0 0
    %572 = vmatprep.mubr.bf16.mxu0 0
    %573 = vmatmul.mubr.bf16.gmra.mrb[0].mxu0 %v535
    %v574 = vpop.f32.mrb[0].mxu0
    %v575 = vadd.f32 %v506, %v574
    %v576 = vpop.f32.mrb[0].mxu0
    %v577 = vpop.f32.mrb[0].mxu0
    %v578 = vadd.f32 %v511, %v577
    %v579 = vpop.f32.mrb[0].mxu0
    %580 = vmatprep.mubr.bf16.mxu0 0
    %581 = vmatmul.mubr.bf16.gmra.mrb[0].mxu0 %v538
    %v582 = vpop.f32.mrb[0].mxu0
    %v583 = vadd.f32 %v516, %v582
    %v584 = vpop.f32.mrb[0].mxu0
    %v585 = vpop.f32.mrb[0].mxu0
    %v586 = vadd.f32 %v521, %v585
    %v587 = vpop.f32.mrb[0].mxu0
    %588 = vdwg.mxu0
    %v589 = vmax.f32 %v575, 0.0
    %v590 = vmax.f32 %v578, 0.0
    %v591 = vmax.f32 %v583, 0.0
    %v592 = vmax.f32 %v586, 0.0
    %v593 = vpack.c.bf16 %v590, %v589
    %v594 = vpack.c.bf16 %v592, %v591
    %v595 = vld [vmem:[%s7] sm:$0xf]
    %v596 = vld [vmem:[%s8] sm:$0xff]
    %598 = vset.pattern.permute.xlu0 0
    %599 = vperm.xlu0 %598, %v596
    %v600 = vpop.permute.xlu0 %599
    %vm602 = vcmask 261120
    %v604 = vsel %vm602, %v595, 0
    %606 = vmatprep.subr.bf16.mxu0 0
    %607 = vmatpush1.bf16.msra.mxu0 %v593
    %608 = vmatprep.subr.bf16.mxu0 0
    %609 = vmatpush1.bf16.msra.mxu0 %v594
    %610 = vmatprep.subr.bf16.mxu0 0
    %611 = vmatpush1.bf16.msra.mxu0 0
    %612 = vmatprep.subr.bf16.mxu0 0
    %613 = vmatpush1.bf16.msra.mxu0 0
    %614 = vmatprep.subr.bf16.mxu0 0
    %615 = vmatpush1.bf16.msra.mxu0 0
    %616 = vmatprep.subr.bf16.mxu0 0
    %617 = vmatpush1.bf16.msra.mxu0 0
    %618 = vmatprep.subr.bf16.mxu0 0
    %619 = vmatpush1.bf16.msra.mxu0 0
    %620 = vmatprep.subr.bf16.mxu0 0
    %621 = vmatpush1.bf16.msra.mxu0 0
    %622 = vmatprep.subr.bf16.mxu0 0
    %623 = vmatpush1.bf16.msra.mxu0 0
    %624 = vmatprep.subr.bf16.mxu0 0
    %625 = vmatpush1.bf16.msra.mxu0 0
    %626 = vmatprep.subr.bf16.mxu0 0
    %627 = vmatpush1.bf16.msra.mxu0 0
    %628 = vmatprep.subr.bf16.mxu0 0
    %629 = vmatpush1.bf16.msra.mxu0 0
    %630 = vmatprep.subr.bf16.mxu0 0
    %631 = vmatpush1.bf16.msra.mxu0 0
    %632 = vmatprep.subr.bf16.mxu0 0
    %633 = vmatpush1.bf16.msra.mxu0 0
    %634 = vmatprep.subr.bf16.mxu0 0
    %635 = vmatpush1.bf16.msra.mxu0 0
    %636 = vmatprep.subr.bf16.mxu0 0
    %637 = vmatpush1.bf16.msra.mxu0 0
    %638 = vmatprep.mubr.bf16.mxu0 0
    %639 = vmatmul.mubr.bf16.gmra.mrb[0].mxu0 %v604
    %v640 = vpop.f32.mrb[0].mxu0
    %v641 = vadd.f32 %v600, %v640
    %v642 = vpop.f32.mrb[0].mxu0
    %v643 = vpop.f32.mrb[0].mxu0
    %v644 = vpop.f32.mrb[0].mxu0
    %645 = vdwg.mxu0
    %646 = vst [vmem:[#allocation2] sm:$0xff] %v641
    // Predicated region
    $region38: #{tpu_custom_call.1} parent=1 // pred_check
      _
    $region39: #{tpu_custom_call.1} parent=1 // pred_check_branch
      %648 = sbr.rel (0) target = $region41
    $region40: #{tpu_custom_call.1} parent=1 // pred_region
      %s650 = ssub.s32 128, 128
      %651 = vsyncadd [#allocation3], %s650
      %s653 = sshll.u32 [#allocation2], 4
      %s654 = int_to_ptr.vmem [resolvable:$true] %s653
      %656 = dma.vmem_to_hbm [thread:$0]  %s654, 128, %s9, [#allocation3]
    $region41: #{tpu_custom_call.1} parent=1 // pred_fallthru
      _
    // Predicated region
    $region42: #{tpu_custom_call.1} parent=1 // pred_check
      _
    $region43: #{tpu_custom_call.1} parent=1 // pred_check_branch
      %658 = sbr.rel (0) target = $region45
    $region44: #{tpu_custom_call.1} parent=1 // pred_region
      %659 = dma.done [#allocation3], 128
    $region45: #{tpu_custom_call.1} parent=1 // pred_fallthru
      _
    %660 = vsyncpa [#allocation3], 1

</llo_original>
